<compile_context>
chip_gen: v6e
topology: v6e:2x2x1
jax: 0.10.0
libtpu: 0.0.40
codegen_flags: <defaults>
</compile_context>

<pallas_src>
import functools

import jax
import jax.numpy as jnp
from jax.experimental import pallas as pl
from jax.experimental.pallas import tpu as pltpu


def _cdiv(a, b):
    return -(-a // b)


def _round_up(x, m):
    return ((x + m - 1) // m) * m


def _vmem_capacity_bytes():
    # Physical VMEM per TensorCore; conservative (v7x-sized) fallback if the
    # query is unavailable on this jax version / backend.
    try:
        v = int(pltpu.get_tpu_info().vmem_capacity_bytes)
        if v >= 16 * 1024 * 1024:
            return v
    except Exception:
        pass
    return 64 * 1024 * 1024


def embedding_kernel(x_ref, w_ref, b_ref, o_ref, acc_ref, *, hw, thw):
    # x_ref  : (TN*C, THW)  input dtype (f32 or bf16); last batch/spatial block
    #                       may be ragged (out-of-bounds region holds garbage).
    # w_ref  : (C, D)       f32, already scaled by 1/(H*W)   (VMEM resident)
    # b_ref  : (1, D)       f32                               (VMEM resident)
    # o_ref  : (TN, D)      f32
    # acc_ref: (TN*C, 128)  f32 scratch, lane-wide running spatial sum
    k = pl.program_id(1)
    last_k = pl.num_programs(1) - 1

    @pl.when(k == 0)
    def _init():
        acc_ref[...] = jnp.zeros_like(acc_ref)

    ragged_hw = (hw % thw) != 0
    valid = hw - k * thw  # >= thw for every block except a ragged last one

    def chunk(start, width):
        xs = x_ref[:, start:start + width].astype(jnp.float32)
        if ragged_hw:
            col = start + jax.lax.broadcasted_iota(jnp.int32, xs.shape, 1)
            xs = jnp.where(col < valid, xs, 0.0)  # zero the spatial tail
        return xs

    n_full = thw // 128
    tail = thw - n_full * 128

    # Lane-aligned running sum: pure VPU adds per step, no cross-lane XLU work.
    if n_full:
        part = chunk(0, 128)
        for j in range(1, n_full):
            part = part + chunk(j * 128, 128)
        acc_ref[...] += part
    if tail:
        acc_ref[:, :tail] += chunk(n_full * 128, tail)

    @pl.when(k == last_k)
    def _finalize():
        tn, d = o_ref.shape
        c = w_ref.shape[0]
        # One cross-lane reduce + tiny (TN*C,1)->(TN,C) relayout per batch tile.
        pooled = jnp.sum(acc_ref[...], axis=-1, keepdims=True).reshape(tn, c)
        if c <= 8:
            # K=C is tiny: C broadcast multiply-adds on the VPU beat a (TN,C)x(C,D)
            # MXU pass (and its feed relayouts) at this size.
            out = jnp.broadcast_to(b_ref[...], (tn, d)).astype(jnp.float32)
            for ch in range(c):
                out = out + pooled[:, ch:ch + 1] * w_ref[ch:ch + 1, :]
        else:
            out = jnp.dot(pooled, w_ref[...],
                          preferred_element_type=jnp.float32) + b_ref[...]
        # Note: D=32 => masked partial vst; negligible (once per batch tile).
        o_ref[...] = out.astype(o_ref.dtype)


def _choose_tiles(n, c, hw, itemsize, per_buf_bytes):
    """Pick (TN, THW): multi-MiB x buffers, >=2 batch tiles when N allows (v7x
    megacore), and every block dim a multiple of (8,128) or the full dim."""
    if n < 8:
        # Single exact batch tile: block row dims equal the full array dims, so
        # no (8,128) divisibility concern and no padding anywhere.
        tn = n
    else:
        n_floor8 = (n // 8) * 8
        if n >= 16:
            # Guarantee >= 2 tiles on the 'parallel' axis (both v7x TensorCores).
            tn_hi = min(n_floor8, _round_up(_cdiv(n, 2), 8))
        else:
            tn_hi = n_floor8
        # Budget cap assuming the spatial tile never shrinks below 128 lanes.
        tn_budget = max(8, (per_buf_bytes // (c * 128 * itemsize)) // 8 * 8)
        tn_hi = max(8, min(tn_hi, tn_budget))
        # Search multiples of 8 near the derived tile; minimise ragged-tail
        # waste, prefer the larger tile on ties (amortise ~0.35us/step cost).
        tn, best = tn_hi, None
        lo = max(8, (tn_hi // 2) // 8 * 8)
        for cand in range(lo, tn_hi + 1, 8):
            key = (_round_up(n, cand) - n, -cand)
            if best is None or key < best:
                best, tn = key, cand

    # Spatial tile: re-derive from the budget that remains once TN is known.
    # Multiple of 128, capped at full H*W, and capped at 32768 lanes so the
    # unrolled per-step VPU accumulation stays a modest number of ops.
    row_bytes = max(1, tn * c * itemsize)
    thw = (per_buf_bytes // row_bytes) // 128 * 128
    thw = max(128, min(thw, 32768))
    if thw >= hw:
        thw = hw  # full spatial extent: single reduction step, no mask needed
    return tn, thw


def embedding_module(x_nchw, weight, bias):
    """Forward of EmbeddingModule. x_nchw: (N,C,H,W); weight: (D,C) torch-style; bias: (D,)."""
    n, c, h, w = x_nchw.shape
    d = weight.shape[0]
    hw = h * w
    itemsize = jnp.dtype(x_nchw.dtype).itemsize

    vmem_phys = _vmem_capacity_bytes()
    # Total budget for the two double-buffered x blocks: ~1/3 of physical VMEM
    # (~21 MiB on v7x's 64 MiB; capped at 32 MiB on v5e/v6e's 128 MiB).
    x_block_budget = min(32 * 1024 * 1024, max(16 * 1024 * 1024, vmem_phys // 3))
    tn, thw = _choose_tiles(n, c, hw, itemsize, x_block_budget // 2)

    n_tiles = _cdiv(n, tn)
    k_tiles = _cdiv(hw, thw)

    # Dense lane-major slab; NO padding copy of x (ragged last blocks handled by
    # masked DMA/stores + the in-kernel spatial-tail mask).
    x2d = x_nchw.reshape(n * c, hw)

    # Fold 1/(H*W) into the weight: Linear(mean(x)) == sum(x) @ (W^T / HW) + b.
    # (Only changes rounding slightly for extremely large H*W.)
    w_scaled = weight.T.astype(jnp.float32) * jnp.float32(1.0 / hw)   # (C, D)
    b2d = bias.reshape(1, d).astype(jnp.float32)                      # (1, D)

    # Explicit VMEM limit from the actual footprint (2x headroom), capped below
    # physical VMEM to leave room for Mosaic internal scratch.
    needed = (
        2 * tn * c * thw * itemsize        # double-buffered x blocks
        + 2 * tn * d * 4                   # double-buffered out blocks
        + 2 * (c * d * 4 + d * 4)          # resident weight + bias
        + tn * c * 128 * 4                 # lane-wide accumulator scratch
    )
    vmem_cap = max(32 * 1024 * 1024, vmem_phys - 8 * 1024 * 1024)
    vmem_limit = int(min(vmem_cap, max(2 * needed, 16 * 1024 * 1024)))

    kernel = functools.partial(embedding_kernel, hw=hw, thw=thw)

    return pl.pallas_call(
        kernel,
        out_shape=jax.ShapeDtypeStruct((n, d), jnp.float32),
        grid_spec=pltpu.PrefetchScalarGridSpec(
            num_scalar_prefetch=0,
            grid=(n_tiles, k_tiles),
            in_specs=[
                pl.BlockSpec((tn * c, thw), lambda i, k: (i, k)),
                pl.BlockSpec((c, d), lambda i, k: (0, 0)),   # VMEM-resident weight
                pl.BlockSpec((1, d), lambda i, k: (0, 0)),   # VMEM-resident bias
            ],
            out_specs=pl.BlockSpec((tn, d), lambda i, k: (i, 0)),
            scratch_shapes=[pltpu.VMEM((tn * c, 128), jnp.float32)],
        ),
        compiler_params=pltpu.CompilerParams(
            dimension_semantics=("parallel", "arbitrary"),
            vmem_limit_bytes=vmem_limit,
        ),
    )(x2d, w_scaled, b2d)


if __name__ == "__main__":
    # Small shapes consistent with the module: batch=2, in_channels=4,
    # spatial=16x16, desc_channels=32.
    N, C, H, W = 2, 4, 16, 16
    D = 32

    key = jax.random.PRNGKey(0)
    kx, kw, kb = jax.random.split(key, 3)

    x = jax.random.normal(kx, (N, C, H, W), dtype=jnp.float32)
    # Deterministic parameter init (mimics nn.Linear's uniform bound 1/sqrt(C)).
    bound = 1.0 / jnp.sqrt(jnp.float32(C))
    weight = jax.random.uniform(kw, (D, C), minval=-bound, maxval=bound,
                                dtype=jnp.float32)
    bias = jax.random.uniform(kb, (D,), minval=-bound, maxval=bound,
                              dtype=jnp.float32)

    out = embedding_module(x, weight, bias)
    out = jax.block_until_ready(out)

    # Reference check in plain JAX (same semantics as the torch forward).
    ref = jnp.mean(x, axis=(2, 3)) @ weight.T + bias
    assert out.shape == (N, D)
    assert jnp.allclose(out, ref, atol=1e-5, rtol=1e-5)

    print("KERNEL_OK")
</pallas_src>

<mosaic_0001>
module attributes {stable_mosaic.version = 11 : i64} {
  func.func @embedding_kernel(%arg0: i32, %arg1: i32, %arg2: memref<8x256xf32, #tpu.memory_space<vmem>>, %arg3: memref<4x32xf32, #tpu.memory_space<vmem>>, %arg4: memref<1x32xf32, #tpu.memory_space<vmem>>, %arg5: memref<2x32xf32, #tpu.memory_space<vmem>>, %arg6: memref<8x128xf32, #tpu.memory_space<vmem>>) attributes {dimension_semantics = [#tpu.dimension_semantics<parallel>, #tpu.dimension_semantics<arbitrary>], iteration_bounds = array<i64: 1, 1>, scalar_prefetch = 0 : i64, scratch_operands = 1 : i64, tpu.core_type = #tpu.core_type<tc>, window_params = [{transform_indices = @transform_0, window_bounds = array<i64: 8, 256>}, {pipeline_mode = #tpu.pipeline_mode<synchronous>, transform_indices = @transform_1, window_bounds = array<i64: 4, 32>}, {pipeline_mode = #tpu.pipeline_mode<synchronous>, transform_indices = @transform_2, window_bounds = array<i64: 1, 32>}, {transform_indices = @transform_3, window_bounds = array<i64: 2, 32>}]} {
    %c0_i32 = arith.constant 0 : i32
    %0 = arith.cmpi eq, %arg1, %c0_i32 : i32
    %1 = arith.extui %0 : i1 to i32
    %c0_i32_0 = arith.constant 0 : i32
    %2 = arith.cmpi ne, %1, %c0_i32_0 : i32
    scf.if %2 {
      %cst = arith.constant 0.000000e+00 : f32
      %12 = vector.broadcast %cst : f32 to vector<8x128xf32>
      %c0_9 = arith.constant 0 : index
      %c0_10 = arith.constant 0 : index
      %13 = vector.load %arg6[%c0_9, %c0_10] : memref<8x128xf32, #tpu.memory_space<vmem>>, vector<8x128xf32>
      tpu.vector_store %arg6[%c0_9, %c0_10], %12 {strides = array<i32>} : memref<8x128xf32, #tpu.memory_space<vmem>>, vector<8x128xf32>,
    } else {
    }
    %c0 = arith.constant 0 : index
    %c0_1 = arith.constant 0 : index
    %3 = vector.load %arg2[%c0, %c0_1] : memref<8x256xf32, #tpu.memory_space<vmem>>, vector<8x128xf32>
    %c0_2 = arith.constant 0 : index
    %c128 = arith.constant 128 : index
    %4 = vector.load %arg2[%c0_2, %c128] : memref<8x256xf32, #tpu.memory_space<vmem>>, vector<8x128xf32>
    %5 = arith.addf %3, %4 : vector<8x128xf32>
    %c0_3 = arith.constant 0 : index
    %c0_4 = arith.constant 0 : index
    %6 = vector.load %arg6[%c0_3, %c0_4] : memref<8x128xf32, #tpu.memory_space<vmem>>, vector<8x128xf32>
    %7 = arith.addf %6, %5 : vector<8x128xf32>
    %c0_5 = arith.constant 0 : index
    %c0_6 = arith.constant 0 : index
    %8 = vector.load %arg6[%c0_5, %c0_6] : memref<8x128xf32, #tpu.memory_space<vmem>>, vector<8x128xf32>
    tpu.vector_store %arg6[%c0_5, %c0_6], %7 {strides = array<i32>} : memref<8x128xf32, #tpu.memory_space<vmem>>, vector<8x128xf32>,
    %c0_i32_7 = arith.constant 0 : i32
    %9 = arith.cmpi eq, %arg1, %c0_i32_7 : i32
    %10 = arith.extui %9 : i1 to i32
    %c0_i32_8 = arith.constant 0 : i32
    %11 = arith.cmpi ne, %10, %c0_i32_8 : i32
    scf.if %11 {
      %c0_9 = arith.constant 0 : index
      %c0_10 = arith.constant 0 : index
      %12 = vector.load %arg6[%c0_9, %c0_10] : memref<8x128xf32, #tpu.memory_space<vmem>>, vector<8x128xf32>
      %cst = arith.constant dense<0.000000e+00> : vector<8xf32>
      %13 = vector.multi_reduction <add>, %12, %cst [1] : vector<8x128xf32> to vector<8xf32>
      %14 = vector.shape_cast %13 : vector<8xf32> to vector<8x1xf32>
      %15 = vector.shape_cast %14 : vector<8x1xf32> to vector<2x4xf32>
      %c0_11 = arith.constant 0 : index
      %c0_12 = arith.constant 0 : index
      %16 = vector.load %arg4[%c0_11, %c0_12] : memref<1x32xf32, #tpu.memory_space<vmem>>, vector<1x32xf32>
      %17 = vector.shape_cast %16 : vector<1x32xf32> to vector<1x32xf32>
      %18 = vector.broadcast %17 : vector<1x32xf32> to vector<2x32xf32>
      %19 = vector.extract_strided_slice %15 {offsets = [0, 0], sizes = [2, 1], strides = [1, 1]} : vector<2x4xf32> to vector<2x1xf32>
      %c0_13 = arith.constant 0 : index
      %c0_14 = arith.constant 0 : index
      %20 = vector.load %arg3[%c0_13, %c0_14] : memref<4x32xf32, #tpu.memory_space<vmem>>, vector<1x32xf32>
      %21 = vector.broadcast %19 : vector<2x1xf32> to vector<2x32xf32>
      %22 = vector.broadcast %20 : vector<1x32xf32> to vector<2x32xf32>
      %23 = arith.mulf %21, %22 : vector<2x32xf32>
      %24 = arith.addf %18, %23 : vector<2x32xf32>
      %25 = vector.extract_strided_slice %15 {offsets = [0, 1], sizes = [2, 1], strides = [1, 1]} : vector<2x4xf32> to vector<2x1xf32>
      %c1 = arith.constant 1 : index
      %c0_15 = arith.constant 0 : index
      %26 = vector.load %arg3[%c1, %c0_15] : memref<4x32xf32, #tpu.memory_space<vmem>>, vector<1x32xf32>
      %27 = vector.broadcast %25 : vector<2x1xf32> to vector<2x32xf32>
      %28 = vector.broadcast %26 : vector<1x32xf32> to vector<2x32xf32>
      %29 = arith.mulf %27, %28 : vector<2x32xf32>
      %30 = arith.addf %24, %29 : vector<2x32xf32>
      %31 = vector.extract_strided_slice %15 {offsets = [0, 2], sizes = [2, 1], strides = [1, 1]} : vector<2x4xf32> to vector<2x1xf32>
      %c2 = arith.constant 2 : index
      %c0_16 = arith.constant 0 : index
      %32 = vector.load %arg3[%c2, %c0_16] : memref<4x32xf32, #tpu.memory_space<vmem>>, vector<1x32xf32>
      %33 = vector.broadcast %31 : vector<2x1xf32> to vector<2x32xf32>
      %34 = vector.broadcast %32 : vector<1x32xf32> to vector<2x32xf32>
      %35 = arith.mulf %33, %34 : vector<2x32xf32>
      %36 = arith.addf %30, %35 : vector<2x32xf32>
      %37 = vector.extract_strided_slice %15 {offsets = [0, 3], sizes = [2, 1], strides = [1, 1]} : vector<2x4xf32> to vector<2x1xf32>
      %c3 = arith.constant 3 : index
      %c0_17 = arith.constant 0 : index
      %38 = vector.load %arg3[%c3, %c0_17] : memref<4x32xf32, #tpu.memory_space<vmem>>, vector<1x32xf32>
      %39 = vector.broadcast %37 : vector<2x1xf32> to vector<2x32xf32>
      %40 = vector.broadcast %38 : vector<1x32xf32> to vector<2x32xf32>
      %41 = arith.mulf %39, %40 : vector<2x32xf32>
      %42 = arith.addf %36, %41 : vector<2x32xf32>
      %c0_18 = arith.constant 0 : index
      %c0_19 = arith.constant 0 : index
      %43 = vector.load %arg5[%c0_18, %c0_19] : memref<2x32xf32, #tpu.memory_space<vmem>>, vector<2x32xf32>
      tpu.vector_store %arg5[%c0_18, %c0_19], %42 {strides = array<i32>} : memref<2x32xf32, #tpu.memory_space<vmem>>, vector<2x32xf32>,
    } else {
    }
    return
  }
  func.func @transform_0(%arg0: i32, %arg1: i32) -> (i32, i32) {
    %c0_i32 = arith.constant 0 : i32
    return %arg0, %arg1 : i32, i32
  }
  func.func @transform_1(%arg0: i32, %arg1: i32) -> (i32, i32) {
    %c0_i32 = arith.constant 0 : i32
    %c0_i32_0 = arith.constant 0 : i32
    %c0_i32_1 = arith.constant 0 : i32
    return %c0_i32, %c0_i32_0 : i32, i32
  }
  func.func @transform_2(%arg0: i32, %arg1: i32) -> (i32, i32) {
    %c0_i32 = arith.constant 0 : i32
    %c0_i32_0 = arith.constant 0 : i32
    %c0_i32_1 = arith.constant 0 : i32
    return %c0_i32, %c0_i32_0 : i32, i32
  }
  func.func @transform_3(%arg0: i32, %arg1: i32) -> (i32, i32) {
    %c0_i32 = arith.constant 0 : i32
    %c0_i32_0 = arith.constant 0 : i32
    return %arg0, %c0_i32 : i32, i32
  }
}

</mosaic_0001>

<llo_original>
// kernel: tpu_custom_call.1
$region0: #{tpu_custom_call.1}
  #allocation0 [shape = 'u32[]', space=smem, size = 0x4, offset = 0x4, fixed_abs, tag = 'smem constant byte address 0x4 - core index']
  #allocation1 [shape = 'u32[144,128]{1,0:T(1,128)}', space=vmem, size = 0x12000, scoped, tag = 'internal scratch']
  #allocation2 [shape = 'f32[8,128]{1,0:T(8,128)}', space=vmem, size = 0x1000, scoped, tag = 'scratch operand']
  %s0 = inlined_call_operand.hbm [shape: f32[8,256], index: 0, kind: input, shape index: {}]
  %s1 = inlined_call_operand.hbm [shape: f32[4,32], index: 1, kind: input, shape index: {}]
  %s2 = inlined_call_operand.vmem [shape: f32[1,32], index: 2, kind: input, shape index: {}]
  %s3 = inlined_call_operand.hbm [shape: f32[2,32], index: 3, kind: output, shape index: {}]
  %s4 = sld [smem:[#allocation0]]
  $region38: #{tpu_custom_call.1} parent=0
    _
  %s6 = ssub.s32 1, %s4
  %s7 = scalar_select 0, %s6, %s4
  $region1: #{tpu_custom_call.1} parent=0
    #allocation3 [shape = 'u8[8192]{0}', space=vmem, size = 0x2000, scoped, tag = 'input window, operand 0, single buffered']
    #allocation4 [shape = 's32[1]{0}', space=sflag, size = 0x4, scoped, tag = 'scoped memory for tpu_custom_call.1']
    #allocation5 [shape = 's32[1]{0}', space=sflag, size = 0x4, scoped, tag = 'scoped memory for tpu_custom_call.1']
    #allocation6 [shape = 'u8[2048]{0}', space=vmem, size = 0x800, scoped, tag = 'input window, operand 1, single buffered']
    #allocation7 [shape = 's32[1]{0}', space=sflag, size = 0x4, scoped, tag = 'scoped memory for tpu_custom_call.1']
    #allocation8 [shape = 'u8[1024]{0}', space=vmem, size = 0x400, scoped, tag = 'output window, operand 0, single buffered']
    %8 = vsyncpa [#allocation4], 0
    %9 = vsyncpa [#allocation7], 0
    %10 = vsyncpa [#allocation5], 0
    // Predicated region
    $region2: #{tpu_custom_call.1} parent=1 // pred_check
      _
    $region3: #{tpu_custom_call.1} parent=1 // pred_check_branch
      %12 = sbr.rel (0) target = $region5
    $region4: #{tpu_custom_call.1} parent=1 // pred_region
      %s14 = ssub.s32 256, 256
      %15 = vsyncadd [#allocation4], %s14
      %s17 = sshll.u32 [#allocation3], 4
      %s18 = int_to_ptr.vmem [resolvable:$true] %s17
      %20 = dma.hbm_to_vmem [thread:$0]  %s0, 256, %s18, [#allocation4]
    $region5: #{tpu_custom_call.1} parent=1 // pred_fallthru
      _
    // Predicated region
    $region6: #{tpu_custom_call.1} parent=1 // pred_check
      _
    $region7: #{tpu_custom_call.1} parent=1 // pred_check_branch
      %22 = sbr.rel (0) target = $region9
    $region8: #{tpu_custom_call.1} parent=1 // pred_region
      %s24 = ssub.s32 64, 64
      %25 = vsyncadd [#allocation7], %s24
      %s27 = sshll.u32 [#allocation6], 4
      %s28 = int_to_ptr.vmem [resolvable:$true] %s27
      %30 = dma.hbm_to_vmem [thread:$0]  %s1, 64, %s28, [#allocation7]
    $region9: #{tpu_custom_call.1} parent=1 // pred_fallthru
      _
    // Predicated region
    $region10: #{tpu_custom_call.1} parent=1 // pred_check
      _
    $region11: #{tpu_custom_call.1} parent=1 // pred_check_branch
      %32 = sbr.rel (0) target = $region13
    $region12: #{tpu_custom_call.1} parent=1 // pred_region
      _
    $region13: #{tpu_custom_call.1} parent=1 // pred_fallthru
      _
    // Predicated region
    $region14: #{tpu_custom_call.1} parent=1 // pred_check
      _
    $region15: #{tpu_custom_call.1} parent=1 // pred_check_branch
      %34 = sbr.rel (0) target = $region17
    $region16: #{tpu_custom_call.1} parent=1 // pred_region
      %35 = dma.done [#allocation4], 256
    $region17: #{tpu_custom_call.1} parent=1 // pred_fallthru
      _
    // Predicated region
    $region18: #{tpu_custom_call.1} parent=1 // pred_check
      _
    $region19: #{tpu_custom_call.1} parent=1 // pred_check_branch
      %37 = sbr.rel (0) target = $region21
    $region20: #{tpu_custom_call.1} parent=1 // pred_region
      %38 = dma.done [#allocation7], 64
    $region21: #{tpu_custom_call.1} parent=1 // pred_fallthru
      _
    %p39 = scmp.eq.s32.totalorder 0, 0
    // Predicated region
    $region22: #{tpu_custom_call.1} parent=1 // pred_check
      %p40 = pneg %p39
    $region23: #{tpu_custom_call.1} parent=1 // pred_check_branch
      %42 = sbr.rel (%p40) target = $region25
    $region24: #{tpu_custom_call.1} parent=1 // pred_region
      %43 = vst [vmem:[#allocation2] sm:$0xff] 0.0
    $region25: #{tpu_custom_call.1} parent=1 // pred_fallthru
      _
    %v44 = vld [vmem:[#allocation3] sm:$0xff]
    %v45 = vld [vmem:[#allocation3 + $0x8] sm:$0xff]
    %v46 = vadd.f32 %v44, %v45
    %v47 = vld [vmem:[#allocation2] sm:$0xff]
    %v48 = vadd.f32 %v47, %v46
    %49 = vst [vmem:[#allocation2] sm:$0xff] %v48
    // Predicated region
    $region26: #{tpu_custom_call.1} parent=1 // pred_check
      %p50 = pneg %p39
    $region27: #{tpu_custom_call.1} parent=1 // pred_check_branch
      %52 = sbr.rel (%p50) target = $region29
    $region28: #{tpu_custom_call.1} parent=1 // pred_region
      %v53 = vld [vmem:[#allocation2] sm:$0xff]
      %54 = vadd.xlane.f32.xlu0 %v53
      %v55 = vpop.xlane.xlu0 %54
      %v58 = vunpack.c.l.s4 839922192
      %v59 = vunpack.c.0.s8 %v58
      %v60 = vlaneseq
      %v61 = vshrl.u32 %v60, 7
      %v62 = vsub.s32 %v59, %v61
      %v63 = vrot.slane %v55, %v62
      %v65 = vunpack.c.l.s4 1985246804
      %v66 = vunpack.c.0.s8 %v65
      %v67 = vlaneseq
      %v68 = vshrl.u32 %v67, 7
      %v69 = vsub.s32 %v66, %v68
      %v70 = vrot.slane %v55, %v69
      %v73 = vld [vmem:[%s2] sm:$0x1]
      %v75 = vlaneseq
      %v76 = vshrl.u32 %v75, 7
      %v77 = vsub.s32 0, %v76
      %v78 = vrot.slane %v73, %v77
      %v80 = vld [vmem:[#allocation6] sm:$0x1]
      %v81 = vlaneseq
      %v82 = vshrl.u32 %v81, 7
      %v83 = vsub.s32 0, %v82
      %v84 = vrot.slane %v63, %v83
      %v85 = vlaneseq
      %v86 = vshrl.u32 %v85, 7
      %v87 = vsub.s32 0, %v86
      %v88 = vrot.slane %v70, %v87
      %v89 = vlaneseq
      %v90 = vshrl.u32 %v89, 7
      %v91 = vsub.s32 0, %v90
      %v92 = vrot.slane %v80, %v91
      %95 = vbcast.lane.b32.xlu0 %v92, 256
      %v96 = vpop.permute.xlu0 %95
      %s98 = sor.u32 256, 8
      %99 = vbcast.lane.b32.xlu0 %v92, %s98
      %v100 = vpop.permute.xlu0 %99
      %s102 = sor.u32 256, 16
      %103 = vbcast.lane.b32.xlu0 %v92, %s102
      %v104 = vpop.permute.xlu0 %103
      %s106 = sor.u32 256, 24
      %107 = vbcast.lane.b32.xlu0 %v92, %s106
      %v108 = vpop.permute.xlu0 %107
      %v113 = vmul.f32 %v84, %v96
      %v114 = vmul.f32 %v84, %v100
      %v115 = vmul.f32 %v84, %v104
      %v116 = vmul.f32 %v84, %v108
      %v117 = vmul.f32 %v88, %v96
      %v118 = vmul.f32 %v88, %v100
      %v119 = vmul.f32 %v88, %v104
      %v120 = vmul.f32 %v88, %v108
      %129 = vset.pattern.permute.xlu0 0
      %130 = vperm.xlu0 %129, %v113
      %v131 = vpop.permute.xlu0 %130
      %132 = vset.pattern.permute.xlu0 0
      %133 = vperm.xlu0 %132, %v114
      %v134 = vpop.permute.xlu0 %133
      %135 = vset.pattern.permute.xlu0 0
      %136 = vperm.xlu0 %135, %v115
      %v137 = vpop.permute.xlu0 %136
      %138 = vset.pattern.permute.xlu0 0
      %139 = vperm.xlu0 %138, %v116
      %v140 = vpop.permute.xlu0 %139
      %141 = vset.pattern.permute.xlu0 0
      %142 = vperm.xlu0 %141, %v117
      %v143 = vpop.permute.xlu0 %142
      %144 = vset.pattern.permute.xlu0 0
      %145 = vperm.xlu0 %144, %v118
      %v146 = vpop.permute.xlu0 %145
      %147 = vset.pattern.permute.xlu0 0
      %148 = vperm.xlu0 %147, %v119
      %v149 = vpop.permute.xlu0 %148
      %150 = vset.pattern.permute.xlu0 0
      %151 = vperm.xlu0 %150, %v120
      %v152 = vpop.permute.xlu0 %151
      %v153 = vlaneseq
      %v154 = vand.u32 %v153, 127
      %v155 = vlaneseq
      %v156 = vshrl.u32 %v155, 7
      %v157 = vsub.s32 %v154, %v156
      %v158 = vrot.slane %v131, %v157
      %v159 = vadd.s32 %v154, 4294967288
      %v160 = vlaneseq
      %v161 = vshrl.u32 %v160, 7
      %v162 = vsub.s32 %v159, %v161
      %v163 = vrot.slane %v134, %v162
      %vm164 = vcmask 130112
      %v165 = vsel %vm164, %v163, %v158
      %v166 = vadd.s32 %v154, 4294967280
      %v167 = vlaneseq
      %v168 = vshrl.u32 %v167, 7
      %v169 = vsub.s32 %v166, %v168
      %v170 = vrot.slane %v137, %v169
      %vm171 = vcmask 195712
      %v172 = vsel %vm171, %v170, %v165
      %v173 = vadd.s32 %v154, 4294967272
      %v174 = vlaneseq
      %v175 = vshrl.u32 %v174, 7
      %v176 = vsub.s32 %v173, %v175
      %v177 = vrot.slane %v140, %v176
      %vm178 = vcmask 261312
      %v179 = vsel %vm178, %v177, %v172
      %v180 = vlaneseq
      %v181 = vshrl.u32 %v180, 7
      %v182 = vsub.s32 %v154, %v181
      %v183 = vrot.slane %v143, %v182
      %v184 = vlaneseq
      %v185 = vshrl.u32 %v184, 7
      %v186 = vsub.s32 %v159, %v185
      %v187 = vrot.slane %v146, %v186
      %v188 = vsel %vm164, %v187, %v183
      %v189 = vlaneseq
      %v190 = vshrl.u32 %v189, 7
      %v191 = vsub.s32 %v166, %v190
      %v192 = vrot.slane %v149, %v191
      %v193 = vsel %vm171, %v192, %v188
      %v194 = vlaneseq
      %v195 = vshrl.u32 %v194, 7
      %v196 = vsub.s32 %v173, %v195
      %v197 = vrot.slane %v152, %v196
      %v198 = vsel %vm178, %v197, %v193
      %vm199 = vcmask 1041409
      %v200 = vsel %vm199, %v198, %v179
      %v202 = vadd.f32 %v78, %v200
      %v203 = vld [vmem:[#allocation6 + $0x1] sm:$0x1]
      %v204 = vlaneseq
      %v205 = vshrl.u32 %v204, 7
      %v206 = vsub.s32 1, %v205
      %v207 = vrot.slane %v63, %v206
      %v208 = vlaneseq
      %v209 = vshrl.u32 %v208, 7
      %v210 = vsub.s32 1, %v209
      %v211 = vrot.slane %v70, %v210
      %v212 = vlaneseq
      %v213 = vshrl.u32 %v212, 7
      %v214 = vsub.s32 0, %v213
      %v215 = vrot.slane %v203, %v214
      %218 = vbcast.lane.b32.xlu0 %v215, 256
      %v219 = vpop.permute.xlu0 %218
      %s221 = sor.u32 256, 8
      %222 = vbcast.lane.b32.xlu0 %v215, %s221
      %v223 = vpop.permute.xlu0 %222
      %s225 = sor.u32 256, 16
      %226 = vbcast.lane.b32.xlu0 %v215, %s225
      %v227 = vpop.permute.xlu0 %226
      %s229 = sor.u32 256, 24
      %230 = vbcast.lane.b32.xlu0 %v215, %s229
      %v231 = vpop.permute.xlu0 %230
      %v236 = vmul.f32 %v207, %v219
      %v237 = vmul.f32 %v207, %v223
      %v238 = vmul.f32 %v207, %v227
      %v239 = vmul.f32 %v207, %v231
      %v240 = vmul.f32 %v211, %v219
      %v241 = vmul.f32 %v211, %v223
      %v242 = vmul.f32 %v211, %v227
      %v243 = vmul.f32 %v211, %v231
      %252 = vset.pattern.permute.xlu0 0
      %253 = vperm.xlu0 %252, %v236
      %v254 = vpop.permute.xlu0 %253
      %255 = vset.pattern.permute.xlu0 0
      %256 = vperm.xlu0 %255, %v237
      %v257 = vpop.permute.xlu0 %256
      %258 = vset.pattern.permute.xlu0 0
      %259 = vperm.xlu0 %258, %v238
      %v260 = vpop.permute.xlu0 %259
      %261 = vset.pattern.permute.xlu0 0
      %262 = vperm.xlu0 %261, %v239
      %v263 = vpop.permute.xlu0 %262
      %264 = vset.pattern.permute.xlu0 0
      %265 = vperm.xlu0 %264, %v240
      %v266 = vpop.permute.xlu0 %265
      %267 = vset.pattern.permute.xlu0 0
      %268 = vperm.xlu0 %267, %v241
      %v269 = vpop.permute.xlu0 %268
      %270 = vset.pattern.permute.xlu0 0
      %271 = vperm.xlu0 %270, %v242
      %v272 = vpop.permute.xlu0 %271
      %273 = vset.pattern.permute.xlu0 0
      %274 = vperm.xlu0 %273, %v243
      %v275 = vpop.permute.xlu0 %274
      %v276 = vlaneseq
      %v277 = vshrl.u32 %v276, 7
      %v278 = vsub.s32 %v154, %v277
      %v279 = vrot.slane %v254, %v278
      %v280 = vlaneseq
      %v281 = vshrl.u32 %v280, 7
      %v282 = vsub.s32 %v159, %v281
      %v283 = vrot.slane %v257, %v282
      %v284 = vsel %vm164, %v283, %v279
      %v285 = vlaneseq
      %v286 = vshrl.u32 %v285, 7
      %v287 = vsub.s32 %v166, %v286
      %v288 = vrot.slane %v260, %v287
      %v289 = vsel %vm171, %v288, %v284
      %v290 = vlaneseq
      %v291 = vshrl.u32 %v290, 7
      %v292 = vsub.s32 %v173, %v291
      %v293 = vrot.slane %v263, %v292
      %v294 = vsel %vm178, %v293, %v289
      %v295 = vlaneseq
      %v296 = vshrl.u32 %v295, 7
      %v297 = vsub.s32 %v154, %v296
      %v298 = vrot.slane %v266, %v297
      %v299 = vlaneseq
      %v300 = vshrl.u32 %v299, 7
      %v301 = vsub.s32 %v159, %v300
      %v302 = vrot.slane %v269, %v301
      %v303 = vsel %vm164, %v302, %v298
      %v304 = vlaneseq
      %v305 = vshrl.u32 %v304, 7
      %v306 = vsub.s32 %v166, %v305
      %v307 = vrot.slane %v272, %v306
      %v308 = vsel %vm171, %v307, %v303
      %v309 = vlaneseq
      %v310 = vshrl.u32 %v309, 7
      %v311 = vsub.s32 %v173, %v310
      %v312 = vrot.slane %v275, %v311
      %v313 = vsel %vm178, %v312, %v308
      %v314 = vsel %vm199, %v313, %v294
      %v316 = vadd.f32 %v202, %v314
      %v317 = vld [vmem:[#allocation6 + $0x2] sm:$0x1]
      %v318 = vlaneseq
      %v319 = vshrl.u32 %v318, 7
      %v320 = vsub.s32 2, %v319
      %v321 = vrot.slane %v63, %v320
      %v322 = vlaneseq
      %v323 = vshrl.u32 %v322, 7
      %v324 = vsub.s32 2, %v323
      %v325 = vrot.slane %v70, %v324
      %v326 = vlaneseq
      %v327 = vshrl.u32 %v326, 7
      %v328 = vsub.s32 0, %v327
      %v329 = vrot.slane %v317, %v328
      %332 = vbcast.lane.b32.xlu0 %v329, 256
      %v333 = vpop.permute.xlu0 %332
      %s335 = sor.u32 256, 8
      %336 = vbcast.lane.b32.xlu0 %v329, %s335
      %v337 = vpop.permute.xlu0 %336
      %s339 = sor.u32 256, 16
      %340 = vbcast.lane.b32.xlu0 %v329, %s339
      %v341 = vpop.permute.xlu0 %340
      %s343 = sor.u32 256, 24
      %344 = vbcast.lane.b32.xlu0 %v329, %s343
      %v345 = vpop.permute.xlu0 %344
      %v350 = vmul.f32 %v321, %v333
      %v351 = vmul.f32 %v321, %v337
      %v352 = vmul.f32 %v321, %v341
      %v353 = vmul.f32 %v321, %v345
      %v354 = vmul.f32 %v325, %v333
      %v355 = vmul.f32 %v325, %v337
      %v356 = vmul.f32 %v325, %v341
      %v357 = vmul.f32 %v325, %v345
      %366 = vset.pattern.permute.xlu0 0
      %367 = vperm.xlu0 %366, %v350
      %v368 = vpop.permute.xlu0 %367
      %369 = vset.pattern.permute.xlu0 0
      %370 = vperm.xlu0 %369, %v351
      %v371 = vpop.permute.xlu0 %370
      %372 = vset.pattern.permute.xlu0 0
      %373 = vperm.xlu0 %372, %v352
      %v374 = vpop.permute.xlu0 %373
      %375 = vset.pattern.permute.xlu0 0
      %376 = vperm.xlu0 %375, %v353
      %v377 = vpop.permute.xlu0 %376
      %378 = vset.pattern.permute.xlu0 0
      %379 = vperm.xlu0 %378, %v354
      %v380 = vpop.permute.xlu0 %379
      %381 = vset.pattern.permute.xlu0 0
      %382 = vperm.xlu0 %381, %v355
      %v383 = vpop.permute.xlu0 %382
      %384 = vset.pattern.permute.xlu0 0
      %385 = vperm.xlu0 %384, %v356
      %v386 = vpop.permute.xlu0 %385
      %387 = vset.pattern.permute.xlu0 0
      %388 = vperm.xlu0 %387, %v357
      %v389 = vpop.permute.xlu0 %388
      %v390 = vlaneseq
      %v391 = vshrl.u32 %v390, 7
      %v392 = vsub.s32 %v154, %v391
      %v393 = vrot.slane %v368, %v392
      %v394 = vlaneseq
      %v395 = vshrl.u32 %v394, 7
      %v396 = vsub.s32 %v159, %v395
      %v397 = vrot.slane %v371, %v396
      %v398 = vsel %vm164, %v397, %v393
      %v399 = vlaneseq
      %v400 = vshrl.u32 %v399, 7
      %v401 = vsub.s32 %v166, %v400
      %v402 = vrot.slane %v374, %v401
      %v403 = vsel %vm171, %v402, %v398
      %v404 = vlaneseq
      %v405 = vshrl.u32 %v404, 7
      %v406 = vsub.s32 %v173, %v405
      %v407 = vrot.slane %v377, %v406
      %v408 = vsel %vm178, %v407, %v403
      %v409 = vlaneseq
      %v410 = vshrl.u32 %v409, 7
      %v411 = vsub.s32 %v154, %v410
      %v412 = vrot.slane %v380, %v411
      %v413 = vlaneseq
      %v414 = vshrl.u32 %v413, 7
      %v415 = vsub.s32 %v159, %v414
      %v416 = vrot.slane %v383, %v415
      %v417 = vsel %vm164, %v416, %v412
      %v418 = vlaneseq
      %v419 = vshrl.u32 %v418, 7
      %v420 = vsub.s32 %v166, %v419
      %v421 = vrot.slane %v386, %v420
      %v422 = vsel %vm171, %v421, %v417
      %v423 = vlaneseq
      %v424 = vshrl.u32 %v423, 7
      %v425 = vsub.s32 %v173, %v424
      %v426 = vrot.slane %v389, %v425
      %v427 = vsel %vm178, %v426, %v422
      %v428 = vsel %vm199, %v427, %v408
      %v430 = vadd.f32 %v316, %v428
      %v431 = vld [vmem:[#allocation6 + $0x3] sm:$0x1]
      %v432 = vlaneseq
      %v433 = vshrl.u32 %v432, 7
      %v434 = vsub.s32 3, %v433
      %v435 = vrot.slane %v63, %v434
      %v436 = vlaneseq
      %v437 = vshrl.u32 %v436, 7
      %v438 = vsub.s32 3, %v437
      %v439 = vrot.slane %v70, %v438
      %v440 = vlaneseq
      %v441 = vshrl.u32 %v440, 7
      %v442 = vsub.s32 0, %v441
      %v443 = vrot.slane %v431, %v442
      %446 = vbcast.lane.b32.xlu0 %v443, 256
      %v447 = vpop.permute.xlu0 %446
      %s449 = sor.u32 256, 8
      %450 = vbcast.lane.b32.xlu0 %v443, %s449
      %v451 = vpop.permute.xlu0 %450
      %s453 = sor.u32 256, 16
      %454 = vbcast.lane.b32.xlu0 %v443, %s453
      %v455 = vpop.permute.xlu0 %454
      %s457 = sor.u32 256, 24
      %458 = vbcast.lane.b32.xlu0 %v443, %s457
      %v459 = vpop.permute.xlu0 %458
      %v464 = vmul.f32 %v435, %v447
      %v465 = vmul.f32 %v435, %v451
      %v466 = vmul.f32 %v435, %v455
      %v467 = vmul.f32 %v435, %v459
      %v468 = vmul.f32 %v439, %v447
      %v469 = vmul.f32 %v439, %v451
      %v470 = vmul.f32 %v439, %v455
      %v471 = vmul.f32 %v439, %v459
      %480 = vset.pattern.permute.xlu0 0
      %481 = vperm.xlu0 %480, %v464
      %v482 = vpop.permute.xlu0 %481
      %483 = vset.pattern.permute.xlu0 0
      %484 = vperm.xlu0 %483, %v465
      %v485 = vpop.permute.xlu0 %484
      %486 = vset.pattern.permute.xlu0 0
      %487 = vperm.xlu0 %486, %v466
      %v488 = vpop.permute.xlu0 %487
      %489 = vset.pattern.permute.xlu0 0
      %490 = vperm.xlu0 %489, %v467
      %v491 = vpop.permute.xlu0 %490
      %492 = vset.pattern.permute.xlu0 0
      %493 = vperm.xlu0 %492, %v468
      %v494 = vpop.permute.xlu0 %493
      %495 = vset.pattern.permute.xlu0 0
      %496 = vperm.xlu0 %495, %v469
      %v497 = vpop.permute.xlu0 %496
      %498 = vset.pattern.permute.xlu0 0
      %499 = vperm.xlu0 %498, %v470
      %v500 = vpop.permute.xlu0 %499
      %501 = vset.pattern.permute.xlu0 0
      %502 = vperm.xlu0 %501, %v471
      %v503 = vpop.permute.xlu0 %502
      %v504 = vlaneseq
      %v505 = vshrl.u32 %v504, 7
      %v506 = vsub.s32 %v154, %v505
      %v507 = vrot.slane %v482, %v506
      %v508 = vlaneseq
      %v509 = vshrl.u32 %v508, 7
      %v510 = vsub.s32 %v159, %v509
      %v511 = vrot.slane %v485, %v510
      %v512 = vsel %vm164, %v511, %v507
      %v513 = vlaneseq
      %v514 = vshrl.u32 %v513, 7
      %v515 = vsub.s32 %v166, %v514
      %v516 = vrot.slane %v488, %v515
      %v517 = vsel %vm171, %v516, %v512
      %v518 = vlaneseq
      %v519 = vshrl.u32 %v518, 7
      %v520 = vsub.s32 %v173, %v519
      %v521 = vrot.slane %v491, %v520
      %v522 = vsel %vm178, %v521, %v517
      %v523 = vlaneseq
      %v524 = vshrl.u32 %v523, 7
      %v525 = vsub.s32 %v154, %v524
      %v526 = vrot.slane %v494, %v525
      %v527 = vlaneseq
      %v528 = vshrl.u32 %v527, 7
      %v529 = vsub.s32 %v159, %v528
      %v530 = vrot.slane %v497, %v529
      %v531 = vsel %vm164, %v530, %v526
      %v532 = vlaneseq
      %v533 = vshrl.u32 %v532, 7
      %v534 = vsub.s32 %v166, %v533
      %v535 = vrot.slane %v500, %v534
      %v536 = vsel %vm171, %v535, %v531
      %v537 = vlaneseq
      %v538 = vshrl.u32 %v537, 7
      %v539 = vsub.s32 %v173, %v538
      %v540 = vrot.slane %v503, %v539
      %v541 = vsel %vm178, %v540, %v536
      %v542 = vsel %vm199, %v541, %v522
      %v544 = vadd.f32 %v430, %v542
      %vm545 = vcmask 254976
      %546 = vst.msk [vmem:[#allocation8] sm:$0x3] %vm545, %v544
    $region29: #{tpu_custom_call.1} parent=1 // pred_fallthru
      _
    // Predicated region
    $region30: #{tpu_custom_call.1} parent=1 // pred_check
      _
    $region31: #{tpu_custom_call.1} parent=1 // pred_check_branch
      %548 = sbr.rel (0) target = $region33
    $region32: #{tpu_custom_call.1} parent=1 // pred_region
      %s550 = ssub.s32 32, 32
      %551 = vsyncadd [#allocation5], %s550
      %s553 = sshll.u32 [#allocation8], 4
      %s554 = int_to_ptr.vmem [resolvable:$true] %s553
      %556 = dma.vmem_to_hbm [thread:$0]  %s554, 32, %s3, [#allocation5]
    $region33: #{tpu_custom_call.1} parent=1 // pred_fallthru
      _
    // Predicated region
    $region34: #{tpu_custom_call.1} parent=1 // pred_check
      _
    $region35: #{tpu_custom_call.1} parent=1 // pred_check_branch
      %558 = sbr.rel (0) target = $region37
    $region36: #{tpu_custom_call.1} parent=1 // pred_region
      %559 = dma.done [#allocation5], 32
    $region37: #{tpu_custom_call.1} parent=1 // pred_fallthru
      _
    %560 = vsyncpa [#allocation4], 1
    %561 = vsyncpa [#allocation7], 1
    %562 = vsyncpa [#allocation5], 1

</llo_original>
